<compile_context>
chip_gen: v6e
topology: v6e:2x2x1
jax: 0.10.0
libtpu: 0.0.40
codegen_flags: <defaults>
</compile_context>

<pallas_src>
import functools

import jax
import jax.numpy as jnp
import numpy as np
from jax.experimental import pallas as pl
from jax.experimental.pallas import tpu as pltpu


# ----------------------------------------------------------------------------
# Wrapper-side (vectorised) construction of the per-ROI separable factors.
# ----------------------------------------------------------------------------
def _axis_weights(start, bin_sz, grid_cnt, n_bins, max_grid, n_feat):
    """Summed separable bilinear weights for one axis of roi_align.

    start, bin_sz: (R,) f32; grid_cnt: (R,) i32.
    Returns (R, n_bins, n_feat) f32:
        W[r, p, f] = sum_{g < grid_cnt[r]} bilinear_weight(pos(r, p, g), f)
    matching torchvision roi_align (aligned=True, sampling_ratio=-1).
    """
    b = jnp.arange(n_bins, dtype=jnp.float32)[None, :, None, None]
    g = jnp.arange(max_grid, dtype=jnp.float32)[None, None, :, None]
    f = jnp.arange(n_feat, dtype=jnp.float32)[None, None, None, :]
    start = start[:, None, None, None]
    bin_sz = bin_sz[:, None, None, None]
    gc = grid_cnt[:, None, None, None].astype(jnp.float32)
    gc_safe = jnp.maximum(gc, 1.0)

    pos = start + b * bin_sz + (g + 0.5) * bin_sz / gc_safe
    valid = (pos >= -1.0) & (pos <= float(n_feat)) & (g < gc)
    pos_c = jnp.clip(pos, 0.0, float(n_feat - 1))
    wgt = jnp.maximum(1.0 - jnp.abs(pos_c - f), 0.0)
    wgt = jnp.where(valid, wgt, 0.0)
    return wgt.sum(axis=2)                                  # (R, n_bins, n_feat)


def _ordered_idxs_table(h, w):
    """The module's `idxs` buffer, reproduced exactly (quirks included)."""
    ys = np.repeat(np.arange(h), w)
    xs = np.tile(np.arange(w), h)
    reverse_ys = np.repeat(np.arange(h - 1, -1, -1), w)
    # torch: arange(w-1,-1,-1).reshape(h,1).repeat(1,w) -> per-ROW value w-1-p
    reverse_xs = np.repeat(np.arange(w - 1, -1, -1), w)
    idxs00 = ys * w + xs
    idxs01 = ys * w + reverse_xs
    idxs10 = reverse_ys * w + xs
    idxs11 = reverse_ys * w + reverse_xs
    table = np.stack([idxs00, idxs01, idxs01, idxs10, idxs11], axis=0)
    return table.astype(np.int32)                           # (5, h*w)


def _build_expanded_factors(starts, goals, h, w, H, W):
    """Per-ROI separable roi_align factors with the ordered gather folded in.

    Returns WYe (R, h*w, H), WXe (R, h*w, W) such that
        out[r, c, k] = sum_{i,j} feats[b_r, c, i, j] * WYe[r,k,i] * WXe[r,k,j]
    equals roi_align(aligned=True).reshape(R, C, h*w).gather(-1, idxs).
    """
    starts = starts.astype(jnp.float32)
    goals = goals.astype(jnp.float32)
    sy, sx = starts[:, 0], starts[:, 1]
    gy, gx = goals[:, 0], goals[:, 1]
    y_min = jnp.minimum(sy, gy)
    x_min = jnp.minimum(sx, gx)
    roi_h = jnp.maximum(sy, gy) - y_min
    roi_w = jnp.maximum(sx, gx) - x_min

    # roi_align(aligned=True, spatial_scale=1.0, sampling_ratio=-1)
    bin_h = roi_h / h
    bin_w = roi_w / w
    grid_h = jnp.ceil(roi_h / h).astype(jnp.int32)
    grid_w = jnp.ceil(roi_w / w).astype(jnp.int32)
    count = jnp.maximum(grid_h * grid_w, 1).astype(jnp.float32)

    # Static bound on the adaptive sampling grid; assumes in-map ROI corners
    # (spatial_scale == 1).  TODO(synk): out-of-map ROIs would need a larger
    # static bound to match torchvision roi_align exactly.
    max_gh = pl.cdiv(H, h)
    max_gw = pl.cdiv(W, w)

    WY = _axis_weights(y_min - 0.5, bin_h, grid_h, h, max_gh, H)    # (R, h, H)
    WX = _axis_weights(x_min - 0.5, bin_w, grid_w, w, max_gw, W)    # (R, w, W)
    WY = WY / count[:, None, None]                                   # fold 1/count

    # Fold the module's ordered gather exactly by expanding the factors over
    # the h*w gathered output positions (the gather is linear but not
    # row/column separable because of the idxs01 anti-diagonal broadcast).
    y_rev = (sy > gy).astype(jnp.int32)
    x_rev = (sx > gx).astype(jnp.int32)
    perm = jnp.asarray(_ordered_idxs_table(h, w))[y_rev * 2 + x_rev]  # (R, hw)
    WYe = jnp.take_along_axis(WY, (perm // w)[:, :, None], axis=1)    # (R,hw,H)
    WXe = jnp.take_along_axis(WX, (perm % w)[:, :, None], axis=1)     # (R,hw,W)
    return WYe, WXe


# ----------------------------------------------------------------------------
# Generation-aware VMEM budgeting / tile selection.
# ----------------------------------------------------------------------------
def _vmem_capacity_bytes():
    """Per-core VMEM capacity; conservative (v7x-sized) fallback."""
    try:
        info = pltpu.get_tpu_info()
        cap = getattr(info, "vmem_capacity_bytes", None)
        if cap:
            return int(cap)
    except Exception:
        pass
    return 64 * 1024 * 1024


def _pick_tiles(Cp, H, W, Lp, budget_bytes):
    """Largest (channel tile, lane tile) whose double-buffered blocks fit."""
    lane_opts = [d for d in range(Lp, 0, -128) if Lp % d == 0] or [Lp]
    chan_opts = [d for d in range(Cp, 0, -8) if Cp % d == 0] or [Cp]

    def usage(tc, tl):
        feats_b = tc * H * W * 2        # bf16, resident per (batch, chan-tile)
        wx_b = W * tl * 2               # bf16, streamed per lane tile
        wy_b = H * tl * 2               # bf16, streamed per lane tile
        out_b = tc * tl * 4             # f32 result tile
        return 2 * (feats_b + wx_b + wy_b + out_b)   # double buffered

    # Prefer large channel tiles (factors are re-streamed once per channel
    # tile), then large lane tiles (lane-dense stores, long DMAs).
    for tc in chan_opts:
        for tl in lane_opts:
            if usage(tc, tl) <= budget_bytes:
                return tc, tl
    return chan_opts[-1], lane_opts[-1]   # best effort: smallest blocks


# ----------------------------------------------------------------------------
# Pallas kernel: one MXU matmul + one broadcast-multiply/reduce per step.
# ----------------------------------------------------------------------------
def _roi_sep_kernel(gidx_ref, f_ref, wx_ref, wy_ref, o_ref):
    """out[c, m] = sum_i sum_j feats[c, i, j] * WXe_T[j, m] * WYe_T[i, m].

    f_ref:  (1, tc*H, W)  bf16  feature-map rows (channel-major) of this tile
    wx_ref: (1, W, tl)    bf16  expanded X factors (ROIs/positions on lanes)
    wy_ref: (1, H, tl)    bf16  expanded Y factors
    o_ref:  (1, tc, tl)   f32
    """
    del gidx_ref                                   # consumed by index_maps only
    H = wy_ref.shape[1]
    tc = f_ref.shape[1] // H
    # MXU: contract the feature-map W axis against the per-position X factors.
    s = jnp.dot(f_ref[0], wx_ref[0], preferred_element_type=jnp.float32)
    # VPU/XLU: contract the H axis against the Y factors.  The lane index m
    # appears on both sides, so this is an elementwise multiply + sublane
    # reduction rather than a second matmul.
    s = s.reshape(tc, H, s.shape[-1])
    wy = wy_ref[0].astype(jnp.float32)
    o_ref[0] = jnp.sum(s * wy[None, :, :], axis=1).astype(o_ref.dtype)


@functools.partial(jax.jit, static_argnames=("h", "w"))
def ordered_roi_sampling(feats, batch_idxs, starts, goals, h, w):
    """feats: (B,C,H,W) f32; batch_idxs: (R,) int; starts/goals: (R,2) (y,x).

    Returns rois: (R, C, h, w), R = B*A (ROIs grouped per batch element).
    """
    assert h == w, "original module requires h == w (reverse_xs reshape)"
    B, C, H, W = feats.shape
    R = batch_idxs.shape[0]
    assert R % B == 0, "expects R = B * A ROIs"
    A = R // B
    hw = h * w

    # ---- per-ROI factors (vectorised, outside the kernel) -------------------
    WYe, WXe = _build_expanded_factors(starts, goals, h, w, H, W)

    # Stack the A ROIs of a batch element (and their h*w output positions)
    # along the lane axis; pad to a multiple of 128 so every store is an
    # unmasked lane-dense vst even when h*w is not lane friendly.
    L = A * hw
    Lp = ((L + 127) // 128) * 128
    wyT = WYe.reshape(B, L, H).transpose(0, 2, 1)            # (B, H, L)
    wxT = WXe.reshape(B, L, W).transpose(0, 2, 1)            # (B, W, L)
    if Lp != L:
        pad = ((0, 0), (0, 0), (0, Lp - L))
        wyT = jnp.pad(wyT, pad)
        wxT = jnp.pad(wxT, pad)
    # bf16 streamed operands: halves HBM->VMEM bytes on a memory-bound kernel;
    # the in-kernel dot accumulates in f32 (preferred_element_type).
    wyT = wyT.astype(jnp.bfloat16)
    wxT = wxT.astype(jnp.bfloat16)

    # Pad channels to a multiple of 8 (full sublanes, unmasked stores).
    Cp = ((C + 7) // 8) * 8
    f = feats if Cp == C else jnp.pad(feats, ((0, 0), (0, Cp - C), (0, 0), (0, 0)))
    f2 = f.reshape(B, Cp * H, W).astype(jnp.bfloat16)

    # Per-group feature-map index (scalar prefetch -> SMEM).  Assumes the A
    # ROIs of each batch element are contiguous in batch_idxs.
    gidx = batch_idxs.reshape(B, A)[:, 0].astype(jnp.int32)

    # ---- generation-aware VMEM budgeting / tiling ---------------------------
    cap = _vmem_capacity_bytes()               # 128 MiB v5e/v6e, 64 MiB v7x
    tile_budget = min(int(cap * 0.70), 96 * 1024 * 1024)
    vmem_limit = min(int(cap * 0.85), 112 * 1024 * 1024)
    tc, tl = _pick_tiles(Cp, H, W, Lp, tile_budget)
    nc, nl = Cp // tc, Lp // tl

    cost = pl.CostEstimate(
        flops=2 * B * Cp * H * W * Lp + 2 * B * Cp * H * Lp,
        transcendentals=0,
        bytes_accessed=f2.size * 2 + nc * (wxT.size + wyT.size) * 2
        + B * Cp * Lp * 4,
    )

    grid_spec = pltpu.PrefetchScalarGridSpec(
        num_scalar_prefetch=1,
        # Lane tiles innermost so the feats block (index depends only on the
        # batch group / channel tile) stays resident and is not re-fetched.
        grid=(B, nc, nl),
        in_specs=[
            # Feature-map rows of this group's batch element / channel tile.
            pl.BlockSpec((1, tc * H, W), lambda b, c, l, gi: (gi[b], c, 0)),
            # Expanded X / Y factors for this lane tile (ROIs x positions).
            # Factors are tiny now, so no extra Buffered() depth is needed.
            pl.BlockSpec((1, W, tl), lambda b, c, l, gi: (b, 0, l)),
            pl.BlockSpec((1, H, tl), lambda b, c, l, gi: (b, 0, l)),
        ],
        out_specs=pl.BlockSpec((1, tc, tl), lambda b, c, l, gi: (b, c, l)),
    )

    out = pl.pallas_call(
        _roi_sep_kernel,
        out_shape=jax.ShapeDtypeStruct((B, Cp, Lp), jnp.float32),
        grid_spec=grid_spec,
        compiler_params=pltpu.CompilerParams(
            # Every step writes a disjoint output block (no cross-step
            # accumulator), so all axes are parallel -> v7x's two TensorCores
            # both get work.  No-op on v5e/v6e.
            dimension_semantics=("parallel", "parallel", "parallel"),
            vmem_limit_bytes=vmem_limit,
        ),
        cost_estimate=cost,
    )(gidx, f2, wxT, wyT)

    # Wrapper-side layout plumbing back to the module's (R, C, h, w).
    out = out[:, :C, :L].reshape(B, C, A, h, w).transpose(0, 2, 1, 3, 4)
    return out.reshape(R, C, h, w).astype(feats.dtype)


# ----------------------------------------------------------------------------
# Independent high-precision reference (numpy, direct roi_align + gather).
# ----------------------------------------------------------------------------
def _bilinear(fmap, y, x, H, W):
    if y < -1.0 or y > H or x < -1.0 or x > W:
        return np.zeros(fmap.shape[0], dtype=np.float64)
    y = min(max(y, 0.0), H - 1.0)
    x = min(max(x, 0.0), W - 1.0)
    y0, x0 = int(np.floor(y)), int(np.floor(x))
    y1, x1 = min(y0 + 1, H - 1), min(x0 + 1, W - 1)
    ly, lx = y - y0, x - x0
    return ((1 - ly) * (1 - lx) * fmap[:, y0, x0] + (1 - ly) * lx * fmap[:, y0, x1]
            + ly * (1 - lx) * fmap[:, y1, x0] + ly * lx * fmap[:, y1, x1])


def _reference_roi_sampling(feats, batch_idxs, starts, goals, h, w):
    feats = np.asarray(feats, dtype=np.float64)
    starts = np.asarray(starts, dtype=np.float64)
    goals = np.asarray(goals, dtype=np.float64)
    bidx = np.asarray(batch_idxs)
    B, C, H, W = feats.shape
    R = bidx.shape[0]
    table = _ordered_idxs_table(h, w)
    out = np.zeros((R, C, h, w), dtype=np.float64)
    for r in range(R):
        sy, sx = starts[r]
        gy, gx = goals[r]
        y0, x0 = min(sy, gy), min(sx, gx)
        roi_h, roi_w = max(sy, gy) - y0, max(sx, gx) - x0
        start_h, start_w = y0 - 0.5, x0 - 0.5
        bin_h, bin_w = roi_h / h, roi_w / w
        gh, gw = int(np.ceil(roi_h / h)), int(np.ceil(roi_w / w))
        count = max(gh * gw, 1)
        fmap = feats[int(bidx[r])]
        roi = np.zeros((C, h, w), dtype=np.float64)
        for p in range(h):
            for q in range(w):
                acc = np.zeros(C, dtype=np.float64)
                for iy in range(gh):
                    y = start_h + p * bin_h + (iy + 0.5) * bin_h / gh
                    for ix in range(gw):
                        x = start_w + q * bin_w + (ix + 0.5) * bin_w / gw
                        acc += _bilinear(fmap, y, x, H, W)
                roi[:, p, q] = acc / count
        idx = int(sy > gy) * 2 + int(sx > gx)
        perm = table[idx]
        out[r] = roi.reshape(C, h * w)[:, perm].reshape(C, h, w)
    return out


if __name__ == "__main__":
    key = jax.random.PRNGKey(0)
    B, C, Hf, Wf = 2, 4, 16, 16
    A = 4                       # agents (ROIs) per batch element
    R = B * A
    h = w = 8                   # RoI output size (module __init__ args)

    k1, k2, k3 = jax.random.split(key, 3)
    feats = jax.random.normal(k1, (B, C, Hf, Wf), dtype=jnp.float32)
    batch_idxs = jnp.repeat(jnp.arange(B, dtype=jnp.int32), A)
    starts = jax.random.randint(k2, (R, 2), 0, Hf, dtype=jnp.int32)  # (y, x)
    goals = jax.random.randint(k3, (R, 2), 0, Hf, dtype=jnp.int32)   # (y, x)

    # The kernel assumes each batch element's A ROIs are contiguous.
    bi = np.asarray(batch_idxs).reshape(B, A)
    assert (bi == bi[:, :1]).all(), "batch_idxs must be grouped per batch element"

    rois = ordered_roi_sampling(feats, batch_idxs, starts, goals, h=h, w=w)
    rois = jax.block_until_ready(rois)
    assert rois.shape == (R, C, h, w)

    # Independent reference: direct (looped) roi_align(aligned=True,
    # sampling_ratio=-1) + the module's ordered gather, in float64.
    # Tolerance accounts for the bf16 streamed operands in the kernel.
    ref = _reference_roi_sampling(np.asarray(feats), np.asarray(batch_idxs),
                                  np.asarray(starts), np.asarray(goals), h, w)
    np.testing.assert_allclose(np.asarray(rois), ref, rtol=5e-2, atol=5e-2)
    assert np.isfinite(np.asarray(rois)).all()
    print("KERNEL_OK")
</pallas_src>

<mosaic_0001>
module attributes {stable_mosaic.version = 11 : i64} {
  func.func @_roi_sep_kernel(%arg0: i32, %arg1: i32, %arg2: i32, %arg3: memref<2xi32, #tpu.memory_space<smem>>, %arg4: memref<1x128x16xbf16, #tpu.memory_space<vmem>>, %arg5: memref<1x16x256xbf16, #tpu.memory_space<vmem>>, %arg6: memref<1x16x256xbf16, #tpu.memory_space<vmem>>, %arg7: memref<1x8x256xf32, #tpu.memory_space<vmem>>) attributes {dimension_semantics = [#tpu.dimension_semantics<parallel>, #tpu.dimension_semantics<parallel>, #tpu.dimension_semantics<parallel>], iteration_bounds = array<i64: 2, 1, 1>, scalar_prefetch = 1 : i64, scratch_operands = 0 : i64, tpu.core_type = #tpu.core_type<tc>, window_params = [{transform_indices = @transform_0, window_bounds = array<i64: 1, 128, 16>}, {transform_indices = @transform_1, window_bounds = array<i64: 1, 16, 256>}, {transform_indices = @transform_2, window_bounds = array<i64: 1, 16, 256>}, {transform_indices = @transform_3, window_bounds = array<i64: 1, 8, 256>}]} {
    %c0 = arith.constant 0 : index
    %c0_0 = arith.constant 0 : index
    %c0_1 = arith.constant 0 : index
    %0 = vector.load %arg4[%c0, %c0_0, %c0_1] : memref<1x128x16xbf16, #tpu.memory_space<vmem>>, vector<1x128x16xbf16>
    %1 = vector.shape_cast %0 : vector<1x128x16xbf16> to vector<128x16xbf16>
    %c0_2 = arith.constant 0 : index
    %c0_3 = arith.constant 0 : index
    %c0_4 = arith.constant 0 : index
    %2 = vector.load %arg5[%c0_2, %c0_3, %c0_4] : memref<1x16x256xbf16, #tpu.memory_space<vmem>>, vector<1x16x256xbf16>
    %3 = vector.shape_cast %2 : vector<1x16x256xbf16> to vector<16x256xbf16>
    %cst = arith.constant dense<0.000000e+00> : vector<128x256xf32>
    %4 = tpu.matmul %1, %3, %cst {dimension_numbers = #tpu.dot_dimension_numbers<[1], [0], [0], [1], [0, 0, 1, 1], [], []>} : vector<128x16xbf16>, vector<16x256xbf16>, vector<128x256xf32> -> vector<128x256xf32>
    %5 = vector.shape_cast %4 : vector<128x256xf32> to vector<8x16x256xf32>
    %c0_5 = arith.constant 0 : index
    %c0_6 = arith.constant 0 : index
    %c0_7 = arith.constant 0 : index
    %6 = vector.load %arg6[%c0_5, %c0_6, %c0_7] : memref<1x16x256xbf16, #tpu.memory_space<vmem>>, vector<1x16x256xbf16>
    %7 = vector.shape_cast %6 : vector<1x16x256xbf16> to vector<16x256xbf16>
    %8 = arith.extf %7 : vector<16x256xbf16> to vector<16x256xf32>
    %9 = vector.shape_cast %8 : vector<16x256xf32> to vector<1x16x256xf32>
    %10 = vector.broadcast %9 : vector<1x16x256xf32> to vector<8x16x256xf32>
    %11 = arith.mulf %5, %10 : vector<8x16x256xf32>
    %cst_8 = arith.constant dense<0.000000e+00> : vector<8x256xf32>
    %12 = vector.multi_reduction <add>, %11, %cst_8 [1] : vector<8x16x256xf32> to vector<8x256xf32>
    %c0_9 = arith.constant 0 : index
    %c0_10 = arith.constant 0 : index
    %c0_11 = arith.constant 0 : index
    %13 = vector.load %arg7[%c0_9, %c0_10, %c0_11] : memref<1x8x256xf32, #tpu.memory_space<vmem>>, vector<1x8x256xf32>
    %14 = vector.shape_cast %13 : vector<1x8x256xf32> to vector<8x256xf32>
    %15 = vector.shape_cast %12 : vector<8x256xf32> to vector<1x8x256xf32>
    tpu.vector_store %arg7[%c0_9, %c0_10, %c0_11], %15 {strides = array<i32>} : memref<1x8x256xf32, #tpu.memory_space<vmem>>, vector<1x8x256xf32>,
    return
  }
  func.func @transform_0(%arg0: i32, %arg1: i32, %arg2: i32, %arg3: memref<2xi32, #tpu.memory_space<smem>>) -> (i32, i32, i32) {
    %0 = arith.index_cast %arg0 : i32 to index
    %1 = memref.load %arg3[%0] : memref<2xi32, #tpu.memory_space<smem>>
    %c0_i32 = arith.constant 0 : i32
    %c0_i32_0 = arith.constant 0 : i32
    return %1, %arg1, %c0_i32 : i32, i32, i32
  }
  func.func @transform_1(%arg0: i32, %arg1: i32, %arg2: i32, %arg3: memref<2xi32, #tpu.memory_space<smem>>) -> (i32, i32, i32) {
    %c0_i32 = arith.constant 0 : i32
    %c0_i32_0 = arith.constant 0 : i32
    return %arg0, %c0_i32, %arg2 : i32, i32, i32
  }
  func.func @transform_2(%arg0: i32, %arg1: i32, %arg2: i32, %arg3: memref<2xi32, #tpu.memory_space<smem>>) -> (i32, i32, i32) {
    %c0_i32 = arith.constant 0 : i32
    %c0_i32_0 = arith.constant 0 : i32
    return %arg0, %c0_i32, %arg2 : i32, i32, i32
  }
  func.func @transform_3(%arg0: i32, %arg1: i32, %arg2: i32, %arg3: memref<2xi32, #tpu.memory_space<smem>>) -> (i32, i32, i32) {
    %c0_i32 = arith.constant 0 : i32
    return %arg0, %arg1, %arg2 : i32, i32, i32
  }
}

</mosaic_0001>

<llo_original>
// kernel: ordered_roi_sampling.1
$region0: #{ordered_roi_sampling.1}
  #allocation0 [shape = 'u32[]', space=smem, size = 0x4, offset = 0x4, fixed_abs, tag = 'smem constant byte address 0x4 - core index']
  #allocation1 [shape = 'u32[144,128]{1,0:T(1,128)}', space=vmem, size = 0x12000, scoped, tag = 'internal scratch']
  #allocation2 [shape = 's32[1]{0}', space=sflag, size = 0x4, scoped, tag = 'scoped memory for ordered_roi_sampling.1']
  #allocation3 [shape = 'u8[512]{0}', space=smem, size = 0x200, scoped, tag = 'prefetched SMEM operand 0']
  %s0 = inlined_call_operand.vmem [shape: s32[2], index: 0, kind: input, shape index: {}]
  %s1 = inlined_call_operand.vmem [shape: bf16[2,128,16], index: 1, kind: input, shape index: {}]
  %s2 = inlined_call_operand.vmem [shape: bf16[2,16,256], index: 2, kind: input, shape index: {}]
  %s3 = inlined_call_operand.vmem [shape: bf16[2,16,256], index: 3, kind: input, shape index: {}]
  %s4 = inlined_call_operand.vmem [shape: f32[2,8,256], index: 4, kind: output, shape index: {}]
  %s5 = sld [smem:[#allocation0]]
  $region45: #{ordered_roi_sampling.1} parent=0
    _
  %s7 = ssub.s32 1, %s5
  %s8 = scalar_select 0, %s7, %s5
  %s9 = sshll.u32 %s0, 4
  %s10 = int_to_ptr.vmem [resolvable:$true] %s9
  %12 = dma.vmem_to_smem %s10, 16, [#allocation3], [#allocation2]
  %13 = dma.done [#allocation2], 16
  %14 = sfence
  loop: start=0, step=1, limit=4
  $region2: #{ordered_roi_sampling.1} parent=0 // loop_pre_header
    _
  $region3: #{ordered_roi_sampling.1} parent=0 // loop_header
    %s16 = sphi 0, %s20
    %p17 = scmp.ge.s32.totalorder %s16, 4
    %s23 = sphi 0, %s42
    %s24 = sphi 0, %s38
    %s25 = sphi 0, %s34
    %s26 = sphi 0, %s23
    %s27 = sphi 0, %s24
    %s28 = sphi 0, %s25
    %s29 = sphi 0, %s26
    %s30 = sphi 0, %s27
    %s31 = sphi 0, %s28
    %s49 = sphi 0, %s51
    %s52 = sphi 0, %s49
    %s53 = sphi 0, %s52
    %s69 = sphi 0, %s53
    %s77 = sphi 0, %s79
    %s80 = sphi 0, %s77
    %s81 = sphi 0, %s80
    %s97 = sphi 0, %s81
    %s105 = sphi 0, %s107
    %s108 = sphi 0, %s105
    %s109 = sphi 0, %s108
    %s125 = sphi 0, %s109
    %s135 = sphi 0, %s137
    %s138 = sphi 0, %s135
    %s139 = sphi 0, %s138
    %s155 = sphi 0, %s139
  $region4: #{ordered_roi_sampling.1} parent=0 // loop_header_branch
    %19 = sbr.rel (%p17) target = $region8
  $region5: #{ordered_roi_sampling.1} parent=0 // loop_body
    %s21 = ssub.s32 %s16, 1
    %s22 = ssub.s32 %s16, 2
    %s32 = sadd.s32 1, %s25
    %p33 = scmp.ge.s32.totalorder %s32, 1
    %s34 = scalar_select %p33, 0, %s32
    %s35 = sadd.s32 1, %s24
    %s36 = scalar_select %p33, %s35, %s24
    %p37 = scmp.ge.s32.totalorder %s36, 1
    %s38 = scalar_select %p37, 0, %s36
    %s39 = sadd.s32 1, %s23
    %s40 = scalar_select %p37, %s39, %s23
    %p41 = scmp.ge.s32.totalorder %s40, 2
    %s42 = scalar_select %p41, 0, %s40
    %s43 = sld [smem:[#allocation3 + %s23]]
    %s44 = sld [smem:[#allocation3 + %s42]]
    %s45 = ssub.s32 %s43, %s44
    %s46 = ssub.s32 %s24, %s38
    %s47 = sor.u32 %s45, %s46
    %p48 = scmp.eq.s32.totalorder %s47, 0
    %s50 = sadd.s32 %s49, 1
    %s51 = scalar_select %p48, %s49, %s50
    %p54 = pneg %p48
    %p55 = scmp.eq.s32.totalorder %s16, 1
    %p56 = por %p54, %p55
    %p57 = scmp.ne.s32.totalorder %s49, %s52
    %p58 = scmp.eq.s32.totalorder %s16, 0
    %p59 = por %p57, %p58
    %p60 = scmp.ne.s32.totalorder %s49, %s52
    %p61 = scmp.eq.s32.totalorder %s21, 1
    %p62 = por %p60, %p61
    %p63 = scmp.ne.s32.totalorder %s52, %s53
    %p64 = scmp.eq.s32.totalorder %s21, 0
    %p65 = por %p63, %p64
    %p66 = scmp.ne.s32.totalorder %s52, %s53
    %p67 = scmp.eq.s32.totalorder %s22, 1
    %p68 = por %p66, %p67
    %p70 = scmp.ne.s32.totalorder %s53, %s69
    %p71 = scmp.eq.s32.totalorder %s22, 0
    %p72 = por %p70, %p71
    %s73 = ssub.s32 %s23, %s42
    %s74 = ssub.s32 %s25, %s34
    %s75 = sor.u32 %s73, %s74
    %p76 = scmp.eq.s32.totalorder %s75, 0
    %s78 = sadd.s32 %s77, 1
    %s79 = scalar_select %p76, %s77, %s78
    %p82 = pneg %p76
    %p83 = scmp.eq.s32.totalorder %s16, 1
    %p84 = por %p82, %p83
    %p85 = scmp.ne.s32.totalorder %s77, %s80
    %p86 = scmp.eq.s32.totalorder %s16, 0
    %p87 = por %p85, %p86
    %p88 = scmp.ne.s32.totalorder %s77, %s80
    %p89 = scmp.eq.s32.totalorder %s21, 1
    %p90 = por %p88, %p89
    %p91 = scmp.ne.s32.totalorder %s80, %s81
    %p92 = scmp.eq.s32.totalorder %s21, 0
    %p93 = por %p91, %p92
    %p94 = scmp.ne.s32.totalorder %s80, %s81
    %p95 = scmp.eq.s32.totalorder %s22, 1
    %p96 = por %p94, %p95
    %p98 = scmp.ne.s32.totalorder %s81, %s97
    %p99 = scmp.eq.s32.totalorder %s22, 0
    %p100 = por %p98, %p99
    %s101 = ssub.s32 %s23, %s42
    %s102 = ssub.s32 %s25, %s34
    %s103 = sor.u32 %s101, %s102
    %p104 = scmp.eq.s32.totalorder %s103, 0
    %s106 = sadd.s32 %s105, 1
    %s107 = scalar_select %p104, %s105, %s106
    %p110 = pneg %p104
    %p111 = scmp.eq.s32.totalorder %s16, 1
    %p112 = por %p110, %p111
    %p113 = scmp.ne.s32.totalorder %s105, %s108
    %p114 = scmp.eq.s32.totalorder %s16, 0
    %p115 = por %p113, %p114
    %p116 = scmp.ne.s32.totalorder %s105, %s108
    %p117 = scmp.eq.s32.totalorder %s21, 1
    %p118 = por %p116, %p117
    %p119 = scmp.ne.s32.totalorder %s108, %s109
    %p120 = scmp.eq.s32.totalorder %s21, 0
    %p121 = por %p119, %p120
    %p122 = scmp.ne.s32.totalorder %s108, %s109
    %p123 = scmp.eq.s32.totalorder %s22, 1
    %p124 = por %p122, %p123
    %p126 = scmp.ne.s32.totalorder %s109, %s125
    %p127 = scmp.eq.s32.totalorder %s22, 0
    %p128 = por %p126, %p127
    %s129 = ssub.s32 %s23, %s42
    %s130 = ssub.s32 %s24, %s38
    %s131 = sor.u32 %s129, %s130
    %s132 = ssub.s32 %s25, %s34
    %s133 = sor.u32 %s131, %s132
    %p134 = scmp.eq.s32.totalorder %s133, 0
    %s136 = sadd.s32 %s135, 1
    %s137 = scalar_select %p134, %s135, %s136
    %p140 = pneg %p134
    %p141 = scmp.eq.s32.totalorder %s16, 1
    %p142 = por %p140, %p141
    %p143 = scmp.ne.s32.totalorder %s135, %s138
    %p144 = scmp.eq.s32.totalorder %s16, 0
    %p145 = por %p143, %p144
    %p146 = scmp.ne.s32.totalorder %s135, %s138
    %p147 = scmp.eq.s32.totalorder %s21, 1
    %p148 = por %p146, %p147
    %p149 = scmp.ne.s32.totalorder %s138, %s139
    %p150 = scmp.eq.s32.totalorder %s21, 0
    %p151 = por %p149, %p150
    %p152 = scmp.ne.s32.totalorder %s138, %s139
    %p153 = scmp.eq.s32.totalorder %s22, 1
    %p154 = por %p152, %p153
    %p156 = scmp.ne.s32.totalorder %s139, %s155
    %p157 = scmp.eq.s32.totalorder %s22, 0
    %p158 = por %p156, %p157
    %p159 = scmp.le.s32.totalorder 1, %s16
    %p160 = scmp.lt.s32.totalorder %s16, 3
    %p161 = pnand %p159, %p160
    %p162 = pneg %p161
    // Predicated region
    $region9: #{ordered_roi_sampling.1} parent=5 // pred_check
      _
    $region10: #{ordered_roi_sampling.1} parent=5 // pred_check_branch
      %164 = sbr.rel (%p161) target = $region12
    $region11: #{ordered_roi_sampling.1} parent=5 // pred_region
      %s165 = ssub.s32 %s16, 1
    $region12: #{ordered_roi_sampling.1} parent=5 // pred_fallthru
      _
    %p166 = scmp.lt.s32.totalorder %s16, 2
    // Predicated region
    $region13: #{ordered_roi_sampling.1} parent=5 // pred_check
      %p167 = pneg %p166
    $region14: #{ordered_roi_sampling.1} parent=5 // pred_check_branch
      %169 = sbr.rel (%p167) target = $region16
    $region15: #{ordered_roi_sampling.1} parent=5 // pred_region
      // Predicated region
      $region17: #{ordered_roi_sampling.1} parent=15 // pred_check
        %p170 = pneg %p59
      $region18: #{ordered_roi_sampling.1} parent=15 // pred_check_branch
        %172 = sbr.rel (%p170) target = $region20
      $region19: #{ordered_roi_sampling.1} parent=15 // pred_region
        %s173 = sld [smem:[#allocation3 + %s23]]
        %s174 = smul.u32 16, %s24
        %p175 = scmp.lt.s32.totalorder %s173, 1
        %s176 = scalar_select %p175, %s173, 1
        %p177 = scmp.lt.s32.totalorder %s174, 15
        %s178 = scalar_select %p177, %s174, 15
        %s179 = smul.addr %s176, 16
        %s180 = sadd.s32 %s178, %s179
        %s181 = smul.addr %s180, 4
        %s182 = scalar_lea.vmem %s1, %s181
        %s183 = sld [smem:[#allocation3 + %s23]]
        %s184 = smul.u32 16, %s24
      $region20: #{ordered_roi_sampling.1} parent=15 // pred_fallthru
        _
      // Predicated region
      $region21: #{ordered_roi_sampling.1} parent=15 // pred_check
        %p185 = pneg %p87
      $region22: #{ordered_roi_sampling.1} parent=15 // pred_check_branch
        %187 = sbr.rel (%p185) target = $region24
      $region23: #{ordered_roi_sampling.1} parent=15 // pred_region
        %s188 = smul.u32 2, %s25
        %p189 = scmp.lt.s32.totalorder %s23, 1
        %s190 = scalar_select %p189, %s23, 1
        %p191 = scmp.lt.s32.totalorder %s188, 1
        %s192 = scalar_select %p191, %s188, 1
        %s193 = smul.addr %s190, 4
        %s194 = sadd.s32 %s192, %s193
        %s195 = smul.addr %s194, 4
        %s196 = scalar_lea.vmem %s2, %s195
        %s197 = smul.u32 2, %s25
      $region24: #{ordered_roi_sampling.1} parent=15 // pred_fallthru
        _
      // Predicated region
      $region25: #{ordered_roi_sampling.1} parent=15 // pred_check
        %p198 = pneg %p115
      $region26: #{ordered_roi_sampling.1} parent=15 // pred_check_branch
        %200 = sbr.rel (%p198) target = $region28
      $region27: #{ordered_roi_sampling.1} parent=15 // pred_region
        %s201 = smul.u32 2, %s25
        %p202 = scmp.lt.s32.totalorder %s23, 1
        %s203 = scalar_select %p202, %s23, 1
        %p204 = scmp.lt.s32.totalorder %s201, 1
        %s205 = scalar_select %p204, %s201, 1
        %s206 = smul.addr %s203, 4
        %s207 = sadd.s32 %s205, %s206
        %s208 = smul.addr %s207, 4
        %s209 = scalar_lea.vmem %s3, %s208
        %s210 = smul.u32 2, %s25
      $region28: #{ordered_roi_sampling.1} parent=15 // pred_fallthru
        _
    $region16: #{ordered_roi_sampling.1} parent=5 // pred_fallthru
      _
    %p211 = scmp.le.s32.totalorder 1, %s16
    %p212 = scmp.lt.s32.totalorder %s16, 3
    %p213 = pnand %p211, %p212
    %p214 = pneg %p213
    // Predicated region
    $region29: #{ordered_roi_sampling.1} parent=5 // pred_check
      _
    $region30: #{ordered_roi_sampling.1} parent=5 // pred_check_branch
      %216 = sbr.rel (%p213) target = $region32
    $region31: #{ordered_roi_sampling.1} parent=5 // pred_region
      %s217 = ssub.s32 %s16, 1
      %s218 = sld [smem:[#allocation3 + %s26]]
      %s219 = smul.u32 16, %s27
      %p220 = scmp.lt.s32.totalorder %s218, 1
      %s221 = scalar_select %p220, %s218, 1
      %p222 = scmp.lt.s32.totalorder %s219, 15
      %s223 = scalar_select %p222, %s219, 15
      %s224 = smul.addr %s221, 16
      %s225 = sadd.s32 %s223, %s224
      %s226 = smul.addr %s225, 4
      %s227 = scalar_lea.vmem %s1, %s226
      %p228 = pneg %p65
      %p229 = pneg %p62
      %s230 = smul.u32 2, %s28
      %p231 = scmp.lt.s32.totalorder %s26, 1
      %s232 = scalar_select %p231, %s26, 1
      %p233 = scmp.lt.s32.totalorder %s230, 1
      %s234 = scalar_select %p233, %s230, 1
      %s235 = smul.addr %s232, 4
      %s236 = sadd.s32 %s234, %s235
      %s237 = smul.addr %s236, 4
      %s238 = scalar_lea.vmem %s2, %s237
      %p239 = pneg %p93
      %p240 = pneg %p90
      %s241 = smul.u32 2, %s28
      %p242 = scmp.lt.s32.totalorder %s26, 1
      %s243 = scalar_select %p242, %s26, 1
      %p244 = scmp.lt.s32.totalorder %s241, 1
      %s245 = scalar_select %p244, %s241, 1
      %s246 = smul.addr %s243, 4
      %s247 = sadd.s32 %s245, %s246
      %s248 = smul.addr %s247, 4
      %s249 = scalar_lea.vmem %s3, %s248
      %p250 = pneg %p121
      %p251 = pneg %p118
      %p252 = pneg %p151
      %p253 = pneg %p148
      %s254 = smul.u32 2, %s28
      %p255 = scmp.lt.s32.totalorder %s26, 1
      %s256 = scalar_select %p255, %s26, 1
      %p257 = scmp.lt.s32.totalorder %s27, 0
      %s258 = scalar_select %p257, %s27, 0
      %p259 = scmp.lt.s32.totalorder %s254, 1
      %s260 = scalar_select %p259, %s254, 1
      %s261 = smul.addr %s258, 2
      %s262 = sadd.s32 %s260, %s261
      %s263 = smul.addr %s256, 2
      %s264 = sadd.s32 %s262, %s263
      %s265 = smul.addr %s264, 8
      %s266 = scalar_lea.vmem %s4, %s265
      %s267 = sld [smem:[#allocation3 + %s26]]
      %s268 = smul.u32 16, %s27
      %p269 = scmp.lt.s32.totalorder %s267, 1
      %s270 = scalar_select %p269, %s267, 1
      %p271 = scmp.lt.s32.totalorder %s268, 15
      %s272 = scalar_select %p271, %s268, 15
      %s273 = smul.addr %s270, 16
      %s274 = sadd.s32 %s272, %s273
      %s275 = smul.addr %s274, 4
      %s276 = scalar_lea.vmem %s1, %s275
      %s277 = sld [smem:[#allocation3 + %s26]]
      %s278 = smul.u32 16, %s27
      %s279 = smul.u32 2, %s28
      %p280 = scmp.lt.s32.totalorder %s26, 1
      %s281 = scalar_select %p280, %s26, 1
      %p282 = scmp.lt.s32.totalorder %s279, 1
      %s283 = scalar_select %p282, %s279, 1
      %s284 = smul.addr %s281, 4
      %s285 = sadd.s32 %s283, %s284
      %s286 = smul.addr %s285, 4
      %s287 = scalar_lea.vmem %s2, %s286
      %s288 = smul.u32 2, %s28
      %s289 = smul.u32 2, %s28
      %p290 = scmp.lt.s32.totalorder %s26, 1
      %s291 = scalar_select %p290, %s26, 1
      %p292 = scmp.lt.s32.totalorder %s289, 1
      %s293 = scalar_select %p292, %s289, 1
      %s294 = smul.addr %s291, 4
      %s295 = sadd.s32 %s293, %s294
      %s296 = smul.addr %s295, 4
      %s297 = scalar_lea.vmem %s3, %s296
      %s298 = smul.u32 2, %s28
      %s299 = smul.u32 2, %s28
      %p300 = scmp.lt.s32.totalorder %s26, 1
      %s301 = scalar_select %p300, %s26, 1
      %p302 = scmp.lt.s32.totalorder %s27, 0
      %s303 = scalar_select %p302, %s27, 0
      %p304 = scmp.lt.s32.totalorder %s299, 1
      %s305 = scalar_select %p304, %s299, 1
      %s306 = smul.addr %s303, 2
      %s307 = sadd.s32 %s305, %s306
      %s308 = smul.addr %s301, 2
      %s309 = sadd.s32 %s307, %s308
      %s310 = smul.addr %s309, 8
      %s311 = scalar_lea.vmem %s4, %s310
      %s312 = smul.u32 2, %s28
      %v314 = vld [vmem:[%s276] sm:$0xf]
      %v315 = vld [vmem:[%s276 + $0x4] sm:$0xf]
      %v316 = vld [vmem:[%s276 + $0x8] sm:$0xf]
      %v317 = vld [vmem:[%s276 + $0xc] sm:$0xf]
      %v318 = vld [vmem:[%s276 + $0x10] sm:$0xf]
      %v319 = vld [vmem:[%s276 + $0x14] sm:$0xf]
      %v320 = vld [vmem:[%s276 + $0x18] sm:$0xf]
      %v321 = vld [vmem:[%s276 + $0x1c] sm:$0xf]
      %v322 = vld [vmem:[%s276 + $0x20] sm:$0xf]
      %v323 = vld [vmem:[%s276 + $0x24] sm:$0xf]
      %v324 = vld [vmem:[%s276 + $0x28] sm:$0xf]
      %v325 = vld [vmem:[%s276 + $0x2c] sm:$0xf]
      %v326 = vld [vmem:[%s276 + $0x30] sm:$0xf]
      %v327 = vld [vmem:[%s276 + $0x34] sm:$0xf]
      %v328 = vld [vmem:[%s276 + $0x38] sm:$0xf]
      %v329 = vld [vmem:[%s276 + $0x3c] sm:$0xf]
      %v330 = vld [vmem:[%s287] sm:$0xff]
      %v331 = vld [vmem:[%s287 + $0x8] sm:$0xff]
      %v348 = vunpack.c.l.b16 %v314
      %v349 = vunpack.c.l.b16 %v315
      %v350 = vunpack.c.l.b16 %v316
      %v351 = vunpack.c.l.b16 %v317
      %v352 = vunpack.c.l.b16 %v318
      %v353 = vunpack.c.l.b16 %v319
      %v354 = vunpack.c.l.b16 %v320
      %v355 = vunpack.c.l.b16 %v321
      %v356 = vunpack.c.l.b16 %v322
      %v357 = vunpack.c.l.b16 %v323
      %v358 = vunpack.c.l.b16 %v324
      %v359 = vunpack.c.l.b16 %v325
      %v360 = vunpack.c.l.b16 %v326
      %v361 = vunpack.c.l.b16 %v327
      %v362 = vunpack.c.l.b16 %v328
      %v363 = vunpack.c.l.b16 %v329
      %v364 = vpack.c.b16 %v349, %v348
      %v365 = vpack.c.b16 %v351, %v350
      %v366 = vpack.c.b16 %v353, %v352
      %v367 = vpack.c.b16 %v355, %v354
      %v368 = vpack.c.b16 %v357, %v356
      %v369 = vpack.c.b16 %v359, %v358
      %v370 = vpack.c.b16 %v361, %v360
      %v371 = vpack.c.b16 %v363, %v362
      %v374 = vunpack.c.l.b16 %v330
      %v375 = vunpack.c.h.b16 %v330
      %v376 = vunpack.c.l.b16 %v331
      %v377 = vunpack.c.h.b16 %v331
      %v378 = vpack.c.b16 %v376, %v374
      %v379 = vpack.c.b16 %v377, %v375
      %vm382 = vcmask 130048
      %v384 = vsel %vm382, %v364, 0
      %v387 = vsel %vm382, %v365, 0
      %v390 = vsel %vm382, %v366, 0
      %v393 = vsel %vm382, %v367, 0
      %v396 = vsel %vm382, %v368, 0
      %v399 = vsel %vm382, %v369, 0
      %v402 = vsel %vm382, %v370, 0
      %v405 = vsel %vm382, %v371, 0
      %407 = vmatprep.subr.bf16.mxu0 0
      %408 = vmatpush1.bf16.msra.mxu0 0
      %409 = vmatprep.subr.bf16.mxu0 0
      %410 = vmatpush1.bf16.msra.mxu0 0
      %411 = vmatprep.subr.bf16.mxu0 0
      %412 = vmatpush1.bf16.msra.mxu0 0
      %413 = vmatprep.subr.bf16.mxu0 0
      %414 = vmatpush1.bf16.msra.mxu0 0
      %415 = vmatprep.subr.bf16.mxu0 0
      %416 = vmatpush1.bf16.msra.mxu0 0
      %417 = vmatprep.subr.bf16.mxu0 0
      %418 = vmatpush1.bf16.msra.mxu0 0
      %419 = vmatprep.subr.bf16.mxu0 0
      %420 = vmatpush1.bf16.msra.mxu0 0
      %421 = vmatprep.subr.bf16.mxu0 %v379
      %422 = vmatpush1.bf16.msra.mxu0 %v378
      %423 = vmatprep.subr.bf16.mxu0 0
      %424 = vmatpush2.bf16.msra.mxu0 0
      %425 = vmatprep.subr.bf16.mxu0 0
      %426 = vmatpush2.bf16.msra.mxu0 0
      %427 = vmatprep.subr.bf16.mxu0 0
      %428 = vmatpush2.bf16.msra.mxu0 0
      %429 = vmatprep.subr.bf16.mxu0 0
      %430 = vmatpush2.bf16.msra.mxu0 0
      %431 = vmatprep.subr.bf16.mxu0 0
      %432 = vmatpush2.bf16.msra.mxu0 0
      %433 = vmatprep.subr.bf16.mxu0 0
      %434 = vmatpush2.bf16.msra.mxu0 0
      %435 = vmatprep.subr.bf16.mxu0 0
      %436 = vmatpush2.bf16.msra.mxu0 0
      %437 = vmatprep.subr.bf16.mxu0 0
      %438 = vmatpush2.bf16.msra.mxu0 0
      %439 = vmatprep.mubr.bf16.mxu0 0
      %440 = vmatmul.mubr.bf16.gmra.mxu0 %v384
      %v441 = vpop.f32.mrf.mxu0
      %v442 = vadd.f32 0.0, %v441
      %v443 = vpop.f32.mrf.mxu0
      %v444 = vadd.f32 0.0, %v443
      %v445 = vpop.f32.mrf.mxu0
      %v446 = vadd.f32 0.0, %v445
      %v447 = vpop.f32.mrf.mxu0
      %v448 = vadd.f32 0.0, %v447
      %449 = vmatprep.mubr.bf16.mxu0 0
      %450 = vmatmul.mubr.bf16.gmra.mxu0 %v387
      %v451 = vpop.f32.mrf.mxu0
      %v452 = vadd.f32 0.0, %v451
      %v453 = vpop.f32.mrf.mxu0
      %v454 = vadd.f32 0.0, %v453
      %v455 = vpop.f32.mrf.mxu0
      %v456 = vadd.f32 0.0, %v455
      %v457 = vpop.f32.mrf.mxu0
      %v458 = vadd.f32 0.0, %v457
      %459 = vmatprep.mubr.bf16.mxu0 0
      %460 = vmatmul.mubr.bf16.gmra.mxu0 %v390
      %v461 = vpop.f32.mrf.mxu0
      %v462 = vadd.f32 0.0, %v461
      %v463 = vpop.f32.mrf.mxu0
      %v464 = vadd.f32 0.0, %v463
      %v465 = vpop.f32.mrf.mxu0
      %v466 = vadd.f32 0.0, %v465
      %v467 = vpop.f32.mrf.mxu0
      %v468 = vadd.f32 0.0, %v467
      %469 = vmatprep.mubr.bf16.mxu0 0
      %470 = vmatmul.mubr.bf16.gmra.mxu0 %v393
      %v471 = vpop.f32.mrf.mxu0
      %v472 = vadd.f32 0.0, %v471
      %v473 = vpop.f32.mrf.mxu0
      %v474 = vadd.f32 0.0, %v473
      %v475 = vpop.f32.mrf.mxu0
      %v476 = vadd.f32 0.0, %v475
      %v477 = vpop.f32.mrf.mxu0
      %v478 = vadd.f32 0.0, %v477
      %479 = vmatprep.mubr.bf16.mxu0 0
      %480 = vmatmul.mubr.bf16.gmra.mxu0 %v396
      %v481 = vpop.f32.mrf.mxu0
      %v482 = vadd.f32 0.0, %v481
      %v483 = vpop.f32.mrf.mxu0
      %v484 = vadd.f32 0.0, %v483
      %v485 = vpop.f32.mrf.mxu0
      %v486 = vadd.f32 0.0, %v485
      %v487 = vpop.f32.mrf.mxu0
      %v488 = vadd.f32 0.0, %v487
      %489 = vmatprep.mubr.bf16.mxu0 0
      %490 = vmatmul.mubr.bf16.gmra.mxu0 %v399
      %v491 = vpop.f32.mrf.mxu0
      %v492 = vadd.f32 0.0, %v491
      %v493 = vpop.f32.mrf.mxu0
      %v494 = vadd.f32 0.0, %v493
      %v495 = vpop.f32.mrf.mxu0
      %v496 = vadd.f32 0.0, %v495
      %v497 = vpop.f32.mrf.mxu0
      %v498 = vadd.f32 0.0, %v497
      %499 = vmatprep.mubr.bf16.mxu0 0
      %500 = vmatmul.mubr.bf16.gmra.mxu0 %v402
      %v501 = vpop.f32.mrf.mxu0
      %v502 = vadd.f32 0.0, %v501
      %v503 = vpop.f32.mrf.mxu0
      %v504 = vadd.f32 0.0, %v503
      %v505 = vpop.f32.mrf.mxu0
      %v506 = vadd.f32 0.0, %v505
      %v507 = vpop.f32.mrf.mxu0
      %v508 = vadd.f32 0.0, %v507
      %509 = vmatprep.mubr.bf16.mxu0 0
      %510 = vmatmul.mubr.bf16.gmra.mxu0 %v405
      %v511 = vpop.f32.mrf.mxu0
      %v512 = vadd.f32 0.0, %v511
      %v513 = vpop.f32.mrf.mxu0
      %v514 = vadd.f32 0.0, %v513
      %v515 = vpop.f32.mrf.mxu0
      %v516 = vadd.f32 0.0, %v515
      %v517 = vpop.f32.mrf.mxu0
      %v518 = vadd.f32 0.0, %v517
      %519 = vdwg.mxu0
      %v520 = vld [vmem:[%s297] sm:$0xff]
      %v521 = vld [vmem:[%s297 + $0x8] sm:$0xff]
      %v522 = vunpack.c.l.bf16 %v520
      %v523 = vunpack.c.h.bf16 %v520
      %v524 = vunpack.c.l.bf16 %v521
      %v525 = vunpack.c.h.bf16 %v521
      %v526 = vmul.f32 %v442, %v522
      %v527 = vmul.f32 %v444, %v523
      %v528 = vmul.f32 %v446, %v524
      %v529 = vmul.f32 %v448, %v525
      %v530 = vmul.f32 %v452, %v522
      %v531 = vmul.f32 %v454, %v523
      %v532 = vmul.f32 %v456, %v524
      %v533 = vmul.f32 %v458, %v525
      %v534 = vmul.f32 %v462, %v522
      %v535 = vmul.f32 %v464, %v523
      %v536 = vmul.f32 %v466, %v524
      %v537 = vmul.f32 %v468, %v525
      %v538 = vmul.f32 %v472, %v522
      %v539 = vmul.f32 %v474, %v523
      %v540 = vmul.f32 %v476, %v524
      %v541 = vmul.f32 %v478, %v525
      %v542 = vmul.f32 %v482, %v522
      %v543 = vmul.f32 %v484, %v523
      %v544 = vmul.f32 %v486, %v524
      %v545 = vmul.f32 %v488, %v525
      %v546 = vmul.f32 %v492, %v522
      %v547 = vmul.f32 %v494, %v523
      %v548 = vmul.f32 %v496, %v524
      %v549 = vmul.f32 %v498, %v525
      %v550 = vmul.f32 %v502, %v522
      %v551 = vmul.f32 %v504, %v523
      %v552 = vmul.f32 %v506, %v524
      %v553 = vmul.f32 %v508, %v525
      %v554 = vmul.f32 %v512, %v522
      %v555 = vmul.f32 %v514, %v523
      %v556 = vmul.f32 %v516, %v524
      %v557 = vmul.f32 %v518, %v525
      %v558 = vadd.f32 %v526, %v528
      %v559 = vrot.slane %v558, 4
      %v560 = vadd.f32 %v558, %v559
      %v561 = vrot.slane %v560, 2
      %v562 = vadd.f32 %v560, %v561
      %v563 = vrot.slane %v562, 1
      %v564 = vadd.f32 %v562, %v563
      %v565 = vadd.f32 %v527, %v529
      %v566 = vrot.slane %v565, 4
      %v567 = vadd.f32 %v565, %v566
      %v568 = vrot.slane %v567, 2
      %v569 = vadd.f32 %v567, %v568
      %v570 = vrot.slane %v569, 1
      %v571 = vadd.f32 %v569, %v570
      %v572 = vadd.f32 %v530, %v532
      %v573 = vrot.slane %v572, 4
      %v574 = vadd.f32 %v572, %v573
      %v575 = vrot.slane %v574, 2
      %v576 = vadd.f32 %v574, %v575
      %v577 = vrot.slane %v576, 1
      %v578 = vadd.f32 %v576, %v577
      %v579 = vadd.f32 %v531, %v533
      %v580 = vrot.slane %v579, 4
      %v581 = vadd.f32 %v579, %v580
      %v582 = vrot.slane %v581, 2
      %v583 = vadd.f32 %v581, %v582
      %v584 = vrot.slane %v583, 1
      %v585 = vadd.f32 %v583, %v584
      %v586 = vadd.f32 %v534, %v536
      %v587 = vrot.slane %v586, 4
      %v588 = vadd.f32 %v586, %v587
      %v589 = vrot.slane %v588, 2
      %v590 = vadd.f32 %v588, %v589
      %v591 = vrot.slane %v590, 1
      %v592 = vadd.f32 %v590, %v591
      %v593 = vadd.f32 %v535, %v537
      %v594 = vrot.slane %v593, 4
      %v595 = vadd.f32 %v593, %v594
      %v596 = vrot.slane %v595, 2
      %v597 = vadd.f32 %v595, %v596
      %v598 = vrot.slane %v597, 1
      %v599 = vadd.f32 %v597, %v598
      %v600 = vadd.f32 %v538, %v540
      %v601 = vrot.slane %v600, 4
      %v602 = vadd.f32 %v600, %v601
      %v603 = vrot.slane %v602, 2
      %v604 = vadd.f32 %v602, %v603
      %v605 = vrot.slane %v604, 1
      %v606 = vadd.f32 %v604, %v605
      %v607 = vadd.f32 %v539, %v541
      %v608 = vrot.slane %v607, 4
      %v609 = vadd.f32 %v607, %v608
      %v610 = vrot.slane %v609, 2
      %v611 = vadd.f32 %v609, %v610
      %v612 = vrot.slane %v611, 1
      %v613 = vadd.f32 %v611, %v612
      %v614 = vadd.f32 %v542, %v544
      %v615 = vrot.slane %v614, 4
      %v616 = vadd.f32 %v614, %v615
      %v617 = vrot.slane %v616, 2
      %v618 = vadd.f32 %v616, %v617
      %v619 = vrot.slane %v618, 1
      %v620 = vadd.f32 %v618, %v619
      %v621 = vadd.f32 %v543, %v545
      %v622 = vrot.slane %v621, 4
      %v623 = vadd.f32 %v621, %v622
      %v624 = vrot.slane %v623, 2
      %v625 = vadd.f32 %v623, %v624
      %v626 = vrot.slane %v625, 1
      %v627 = vadd.f32 %v625, %v626
      %v628 = vadd.f32 %v546, %v548
      %v629 = vrot.slane %v628, 4
      %v630 = vadd.f32 %v628, %v629
      %v631 = vrot.slane %v630, 2
      %v632 = vadd.f32 %v630, %v631
      %v633 = vrot.slane %v632, 1
      %v634 = vadd.f32 %v632, %v633
      %v635 = vadd.f32 %v547, %v549
      %v636 = vrot.slane %v635, 4
      %v637 = vadd.f32 %v635, %v636
      %v638 = vrot.slane %v637, 2
      %v639 = vadd.f32 %v637, %v638
      %v640 = vrot.slane %v639, 1
      %v641 = vadd.f32 %v639, %v640
      %v642 = vadd.f32 %v550, %v552
      %v643 = vrot.slane %v642, 4
      %v644 = vadd.f32 %v642, %v643
      %v645 = vrot.slane %v644, 2
      %v646 = vadd.f32 %v644, %v645
      %v647 = vrot.slane %v646, 1
      %v648 = vadd.f32 %v646, %v647
      %v649 = vadd.f32 %v551, %v553
      %v650 = vrot.slane %v649, 4
      %v651 = vadd.f32 %v649, %v650
      %v652 = vrot.slane %v651, 2
      %v653 = vadd.f32 %v651, %v652
      %v654 = vrot.slane %v653, 1
      %v655 = vadd.f32 %v653, %v654
      %v656 = vadd.f32 %v554, %v556
      %v657 = vrot.slane %v656, 4
      %v658 = vadd.f32 %v656, %v657
      %v659 = vrot.slane %v658, 2
      %v660 = vadd.f32 %v658, %v659
      %v661 = vrot.slane %v660, 1
      %v662 = vadd.f32 %v660, %v661
      %v663 = vadd.f32 %v555, %v557
      %v664 = vrot.slane %v663, 4
      %v665 = vadd.f32 %v663, %v664
      %v666 = vrot.slane %v665, 2
      %v667 = vadd.f32 %v665, %v666
      %v668 = vrot.slane %v667, 1
      %v669 = vadd.f32 %v667, %v668
      %vm686 = vcmask 1041409
      %v687 = vsel %vm686, %v578, %v564
      %vm688 = vcmask 1042434
      %v689 = vsel %vm688, %v592, %v687
      %vm690 = vcmask 1043459
      %v691 = vsel %vm690, %v606, %v689
      %vm692 = vcmask 1044484
      %v693 = vsel %vm692, %v620, %v691
      %vm694 = vcmask 1045509
      %v695 = vsel %vm694, %v634, %v693
      %vm696 = vcmask 1046534
      %v697 = vsel %vm696, %v648, %v695
      %vm698 = vcmask 1047559
      %v699 = vsel %vm698, %v662, %v697
      %v700 = vsel %vm686, %v585, %v571
      %v701 = vsel %vm688, %v599, %v700
      %v702 = vsel %vm690, %v613, %v701
      %v703 = vsel %vm692, %v627, %v702
      %v704 = vsel %vm694, %v641, %v703
      %v705 = vsel %vm696, %v655, %v704
      %v706 = vsel %vm698, %v669, %v705
      %709 = vst [vmem:[%s311] sm:$0xff] %v699
      %710 = vst [vmem:[%s311 + $0x8] sm:$0xff] %v706
      %s711 = smul.u32 2, %s28
      %p712 = scmp.lt.s32.totalorder %s26, 1
      %s713 = scalar_select %p712, %s26, 1
      %p714 = scmp.lt.s32.totalorder %s27, 0
      %s715 = scalar_select %p714, %s27, 0
      %p716 = scmp.lt.s32.totalorder %s711, 1
      %s717 = scalar_select %p716, %s711, 1
      %s718 = smul.addr %s715, 2
      %s719 = sadd.s32 %s717, %s718
      %s720 = smul.addr %s713, 2
      %s721 = sadd.s32 %s719, %s720
      %s722 = smul.addr %s721, 8
      %s723 = scalar_lea.vmem %s4, %s722
      // Predicated region
      $region33: #{ordered_roi_sampling.1} parent=31 // pred_check
        %p724 = pneg %p148
      $region34: #{ordered_roi_sampling.1} parent=31 // pred_check_branch
        %726 = sbr.rel (%p724) target = $region36
      $region35: #{ordered_roi_sampling.1} parent=31 // pred_region
        %s727 = smul.u32 2, %s28
      $region36: #{ordered_roi_sampling.1} parent=31 // pred_fallthru
        _
    $region32: #{ordered_roi_sampling.1} parent=5 // pred_fallthru
      _
    %p728 = scmp.le.s32.totalorder 2, %s16
    // Predicated region
    $region37: #{ordered_roi_sampling.1} parent=5 // pred_check
      %p729 = pneg %p728
    $region38: #{ordered_roi_sampling.1} parent=5 // pred_check_branch
      %731 = sbr.rel (%p729) target = $region40
    $region39: #{ordered_roi_sampling.1} parent=5 // pred_region
      %s732 = ssub.s32 %s16, 2
      // Predicated region
      $region41: #{ordered_roi_sampling.1} parent=39 // pred_check
        %p733 = pneg %p154
      $region42: #{ordered_roi_sampling.1} parent=39 // pred_check_branch
        %735 = sbr.rel (%p733) target = $region44
      $region43: #{ordered_roi_sampling.1} parent=39 // pred_region
        %s736 = smul.u32 2, %s31
        %p737 = scmp.lt.s32.totalorder %s29, 1
        %s738 = scalar_select %p737, %s29, 1
        %p739 = scmp.lt.s32.totalorder %s30, 0
        %s740 = scalar_select %p739, %s30, 0
        %p741 = scmp.lt.s32.totalorder %s736, 1
        %s742 = scalar_select %p741, %s736, 1
        %s743 = smul.addr %s740, 2
        %s744 = sadd.s32 %s742, %s743
        %s745 = smul.addr %s738, 2
        %s746 = sadd.s32 %s744, %s745
        %s747 = smul.addr %s746, 8
        %s748 = scalar_lea.vmem %s4, %s747
      $region44: #{ordered_roi_sampling.1} parent=39 // pred_fallthru
        _
    $region40: #{ordered_roi_sampling.1} parent=5 // pred_fallthru
      _
  $region6: #{ordered_roi_sampling.1} parent=0 // loop_footer
    %s20 = sadd.s32 1, %s16
  $region7: #{ordered_roi_sampling.1} parent=0 // loop_footer_branch
    %15 = sbr.rel target = $region3
  $region8: #{ordered_roi_sampling.1} parent=0 // loop_exit
    _

</llo_original>
